<compile_context>
chip_gen: v5e
topology: v5e:2x2
jax: 0.10.0
libtpu: 0.0.40
codegen_flags: <defaults>
</compile_context>

<pallas_src>
import functools

import jax
import jax.numpy as jnp
from jax.experimental import pallas as pl
from jax.experimental.pallas import tpu as pltpu


def _round_up(x: int, m: int) -> int:
    return ((x + m - 1) // m) * m


def _fused_mlp_kernel(x_ref, w1_ref, b1_ref, w2_ref, b2_ref, w3_ref, b3_ref, o_ref):
    """One batch tile through the whole MLP; intermediates never touch HBM.

    Matmuls run on the MXU in bf16 with f32 accumulation; the elementwise
    epilogues (bias add, ReLU) stay in f32.
    """
    x = x_ref[...]                      # (TB, 784), ideally already bf16
    if x.dtype != jnp.bfloat16:         # static check; no-op when fed bf16
        x = x.astype(jnp.bfloat16)

    # Layer 1: (TB, 784) @ (784, 256) + b1, ReLU
    h = jnp.dot(x, w1_ref[...], preferred_element_type=jnp.float32)
    h = jnp.maximum(h + b1_ref[...], 0.0)

    # Layer 2: (TB, 256) @ (256, 128) + b2, ReLU
    h = jnp.dot(h.astype(jnp.bfloat16), w2_ref[...],
                preferred_element_type=jnp.float32)
    h = jnp.maximum(h + b2_ref[...], 0.0)

    # Output layer: (TB, 128) @ (128, 128-padded) + b3   (no activation)
    y = jnp.dot(h.astype(jnp.bfloat16), w3_ref[...],
                preferred_element_type=jnp.float32)
    o_ref[...] = (y + b3_ref[...]).astype(o_ref.dtype)   # lane-dense bf16 store


def _pick_batch_tile(B: int, cap: int = 512) -> int:
    """Batch tile: full batch for tiny B; >=2 tiles (16-aligned) otherwise."""
    if B <= 16:
        return B                                   # full-dim block, no padding
    half = _round_up(-(-B // 2), 16)               # ceil(B/2) rounded to 16
    return min(cap, half)


def fused_mlp(x, params_prepared, *, out_size, out_dtype=jnp.bfloat16,
              batch_tile=None):
    """Fused 3-layer MLP forward. x: (B, 784). Returns (B, out_size)."""
    (w1, b1), (w2, b2), (w3, b3) = params_prepared
    B, IN = x.shape
    assert w1.shape[0] == IN
    H1 = w1.shape[1]
    H2 = w2.shape[1]
    OUT_PAD = w3.shape[1]

    TB = _pick_batch_tile(B) if batch_tile is None else batch_tile
    B_pad = _round_up(B, TB)

    # Pad the batch axis only if B is not a tile multiple (no feature padding).
    xk = x
    if B_pad != B:
        xk = jnp.zeros((B_pad, IN), x.dtype).at[:B].set(x)

    out = pl.pallas_call(
        _fused_mlp_kernel,
        out_shape=jax.ShapeDtypeStruct((B_pad, OUT_PAD), out_dtype),
        grid_spec=pl.GridSpec(
            grid=(B_pad // TB,),
            in_specs=[
                pl.BlockSpec((TB, IN), lambda i: (i, 0)),    # x: batch-tiled
                pl.BlockSpec((IN, H1), lambda i: (0, 0)),    # weights: resident
                pl.BlockSpec((1, H1), lambda i: (0, 0)),
                pl.BlockSpec((H1, H2), lambda i: (0, 0)),
                pl.BlockSpec((1, H2), lambda i: (0, 0)),
                pl.BlockSpec((H2, OUT_PAD), lambda i: (0, 0)),
                pl.BlockSpec((1, OUT_PAD), lambda i: (0, 0)),
            ],
            out_specs=pl.BlockSpec((TB, OUT_PAD), lambda i: (i, 0)),
        ),
        compiler_params=pltpu.CompilerParams(
            dimension_semantics=("parallel",),   # batch tiles -> both TCs on v7x
            vmem_limit_bytes=32 * 1024 * 1024,   # ample on v5e/v6e/v7x
        ),
    )(xk, w1, b1, w2, b2, w3, b3)

    # Drop batch padding and the lane-padding of the 10-wide output.
    # (A downstream consumer could fuse this slice into its own op instead.)
    return out[:B, :out_size]


def init_mlp_params(key, input_size, hidden_sizes, output_size):
    """Deterministic init matching nn.Linear default (U(-1/sqrt(fan_in), +...))."""
    params = []
    sizes = [input_size] + list(hidden_sizes) + [output_size]
    for i in range(len(sizes) - 1):
        fan_in, fan_out = sizes[i], sizes[i + 1]
        key, kw, kb = jax.random.split(key, 3)
        bound = 1.0 / float(fan_in) ** 0.5
        # stored as [in, out] (transposed relative to PyTorch's [out, in])
        w = jax.random.uniform(kw, (fan_in, fan_out), jnp.float32, -bound, bound)
        b = jax.random.uniform(kb, (fan_out,), jnp.float32, -bound, bound)
        params.append((w, b))
    return params


def prepare_params(params, *, lane=128):
    """Cast weights to bf16 (biases stay f32, shaped (1, fo)).

    Only the final layer's output dim (10) is zero-padded to a lane multiple
    (128) so the kernel's output store is lane-dense; input/hidden dims are
    left untouched (784 is sublane-aligned and needs no padding).
    """
    prepared = []
    n = len(params)
    for idx, (w, b) in enumerate(params):
        fi, fo = w.shape
        fo_p = _round_up(fo, lane) if idx == n - 1 else fo   # 10 -> 128 (zero cols)
        wp = jnp.zeros((fi, fo_p), jnp.float32).at[:, :fo].set(w).astype(jnp.bfloat16)
        bp = jnp.zeros((1, fo_p), jnp.float32).at[0, :fo].set(b)
        prepared.append((wp, bp))
    return prepared


if __name__ == "__main__":
    hidden_sizes = [256, 128]
    input_size = 784
    output_size = 10
    batch_size = 4

    key = jax.random.PRNGKey(0)
    key, kx = jax.random.split(key)
    x_f32 = jax.random.normal(kx, (batch_size, input_size), jnp.float32)
    # Feed x in bf16 (x dominates HBM traffic; the matmul is bf16 anyway, so
    # this is numerically identical to casting inside the kernel).
    x = x_f32.astype(jnp.bfloat16)

    params = init_mlp_params(key, input_size, hidden_sizes, output_size)
    params_prepared = prepare_params(params)

    fwd = jax.jit(functools.partial(fused_mlp, out_size=output_size))
    out = fwd(x, params_prepared)
    out = jax.block_until_ready(out)
    assert out.shape == (batch_size, output_size)
    out_f32 = out.astype(jnp.float32)

    # Reference 1: identical precision recipe (bf16 operands, f32 accumulate,
    # bf16 output) in plain JAX.
    def ref_same_precision(xb, params):
        h = xb
        for i, (w, b) in enumerate(params):
            z = jnp.dot(h.astype(jnp.bfloat16), w.astype(jnp.bfloat16),
                        preferred_element_type=jnp.float32) + b
            h = jnp.maximum(z, 0.0) if i < len(params) - 1 else z
        return h.astype(jnp.bfloat16).astype(jnp.float32)

    # Reference 2: full-f32 math (PyTorch module semantics), looser tolerance
    # for the bf16 input/weight/output quantization.
    def ref_f32(xf, params):
        h = xf
        for i, (w, b) in enumerate(params):
            z = h @ w + b
            h = jnp.maximum(z, 0.0) if i < len(params) - 1 else z
        return h

    r_bf16 = ref_same_precision(x, params)
    r_f32 = ref_f32(x_f32, params)
    assert jnp.allclose(out_f32, r_bf16, atol=1e-2, rtol=1e-2)
    assert jnp.allclose(out_f32, r_f32, atol=5e-2, rtol=5e-2)

    print("KERNEL_OK")
</pallas_src>

<mosaic_0001>
module attributes {stable_mosaic.version = 11 : i64} {
  func.func @_fused_mlp_kernel(%arg0: i32, %arg1: memref<4x784xbf16, #tpu.memory_space<vmem>>, %arg2: memref<784x256xbf16, #tpu.memory_space<vmem>>, %arg3: memref<1x256xf32, #tpu.memory_space<vmem>>, %arg4: memref<256x128xbf16, #tpu.memory_space<vmem>>, %arg5: memref<1x128xf32, #tpu.memory_space<vmem>>, %arg6: memref<128x128xbf16, #tpu.memory_space<vmem>>, %arg7: memref<1x128xf32, #tpu.memory_space<vmem>>, %arg8: memref<4x128xbf16, #tpu.memory_space<vmem>>) attributes {dimension_semantics = [#tpu.dimension_semantics<parallel>], iteration_bounds = array<i64: 1>, scalar_prefetch = 0 : i64, scratch_operands = 0 : i64, tpu.core_type = #tpu.core_type<tc>, window_params = [{transform_indices = @transform_0, window_bounds = array<i64: 4, 784>}, {pipeline_mode = #tpu.pipeline_mode<synchronous>, transform_indices = @transform_1, window_bounds = array<i64: 784, 256>}, {pipeline_mode = #tpu.pipeline_mode<synchronous>, transform_indices = @transform_2, window_bounds = array<i64: 1, 256>}, {pipeline_mode = #tpu.pipeline_mode<synchronous>, transform_indices = @transform_3, window_bounds = array<i64: 256, 128>}, {pipeline_mode = #tpu.pipeline_mode<synchronous>, transform_indices = @transform_4, window_bounds = array<i64: 1, 128>}, {pipeline_mode = #tpu.pipeline_mode<synchronous>, transform_indices = @transform_5, window_bounds = array<i64: 128, 128>}, {pipeline_mode = #tpu.pipeline_mode<synchronous>, transform_indices = @transform_6, window_bounds = array<i64: 1, 128>}, {transform_indices = @transform_7, window_bounds = array<i64: 4, 128>}]} {
    %c0 = arith.constant 0 : index
    %c0_0 = arith.constant 0 : index
    %0 = vector.load %arg1[%c0, %c0_0] : memref<4x784xbf16, #tpu.memory_space<vmem>>, vector<4x784xbf16>
    %c0_1 = arith.constant 0 : index
    %c0_2 = arith.constant 0 : index
    %1 = vector.load %arg2[%c0_1, %c0_2] : memref<784x256xbf16, #tpu.memory_space<vmem>>, vector<784x256xbf16>
    %cst = arith.constant dense<0.000000e+00> : vector<4x256xf32>
    %2 = tpu.matmul %0, %1, %cst {dimension_numbers = #tpu.dot_dimension_numbers<[1], [0], [0], [1], [0, 0, 1, 1], [], []>} : vector<4x784xbf16>, vector<784x256xbf16>, vector<4x256xf32> -> vector<4x256xf32>
    %c0_3 = arith.constant 0 : index
    %c0_4 = arith.constant 0 : index
    %3 = vector.load %arg3[%c0_3, %c0_4] : memref<1x256xf32, #tpu.memory_space<vmem>>, vector<1x256xf32>
    %4 = vector.broadcast %3 : vector<1x256xf32> to vector<4x256xf32>
    %5 = arith.addf %2, %4 : vector<4x256xf32>
    %cst_5 = arith.constant 0.000000e+00 : f32
    %6 = vector.broadcast %cst_5 : f32 to vector<4x256xf32>
    %7 = arith.maximumf %5, %6 : vector<4x256xf32>
    %8 = arith.truncf %7 : vector<4x256xf32> to vector<4x256xbf16>
    %c0_6 = arith.constant 0 : index
    %c0_7 = arith.constant 0 : index
    %9 = vector.load %arg4[%c0_6, %c0_7] : memref<256x128xbf16, #tpu.memory_space<vmem>>, vector<256x128xbf16>
    %cst_8 = arith.constant dense<0.000000e+00> : vector<4x128xf32>
    %10 = tpu.matmul %8, %9, %cst_8 {dimension_numbers = #tpu.dot_dimension_numbers<[1], [0], [0], [1], [0, 0, 1, 1], [], []>} : vector<4x256xbf16>, vector<256x128xbf16>, vector<4x128xf32> -> vector<4x128xf32>
    %c0_9 = arith.constant 0 : index
    %c0_10 = arith.constant 0 : index
    %11 = vector.load %arg5[%c0_9, %c0_10] : memref<1x128xf32, #tpu.memory_space<vmem>>, vector<1x128xf32>
    %12 = vector.broadcast %11 : vector<1x128xf32> to vector<4x128xf32>
    %13 = arith.addf %10, %12 : vector<4x128xf32>
    %cst_11 = arith.constant 0.000000e+00 : f32
    %14 = vector.broadcast %cst_11 : f32 to vector<4x128xf32>
    %15 = arith.maximumf %13, %14 : vector<4x128xf32>
    %16 = arith.truncf %15 : vector<4x128xf32> to vector<4x128xbf16>
    %c0_12 = arith.constant 0 : index
    %c0_13 = arith.constant 0 : index
    %17 = vector.load %arg6[%c0_12, %c0_13] : memref<128x128xbf16, #tpu.memory_space<vmem>>, vector<128x128xbf16>
    %cst_14 = arith.constant dense<0.000000e+00> : vector<4x128xf32>
    %18 = tpu.matmul %16, %17, %cst_14 {dimension_numbers = #tpu.dot_dimension_numbers<[1], [0], [0], [1], [0, 0, 1, 1], [], []>} : vector<4x128xbf16>, vector<128x128xbf16>, vector<4x128xf32> -> vector<4x128xf32>
    %c0_15 = arith.constant 0 : index
    %c0_16 = arith.constant 0 : index
    %19 = vector.load %arg7[%c0_15, %c0_16] : memref<1x128xf32, #tpu.memory_space<vmem>>, vector<1x128xf32>
    %20 = vector.broadcast %19 : vector<1x128xf32> to vector<4x128xf32>
    %21 = arith.addf %18, %20 : vector<4x128xf32>
    %22 = arith.truncf %21 : vector<4x128xf32> to vector<4x128xbf16>
    %c0_17 = arith.constant 0 : index
    %c0_18 = arith.constant 0 : index
    %23 = vector.load %arg8[%c0_17, %c0_18] : memref<4x128xbf16, #tpu.memory_space<vmem>>, vector<4x128xbf16>
    tpu.vector_store %arg8[%c0_17, %c0_18], %22 {strides = array<i32>} : memref<4x128xbf16, #tpu.memory_space<vmem>>, vector<4x128xbf16>,
    return
  }
  func.func @transform_0(%arg0: i32) -> (i32, i32) {
    %c0_i32 = arith.constant 0 : i32
    %c0_i32_0 = arith.constant 0 : i32
    return %arg0, %c0_i32 : i32, i32
  }
  func.func @transform_1(%arg0: i32) -> (i32, i32) {
    %c0_i32 = arith.constant 0 : i32
    %c0_i32_0 = arith.constant 0 : i32
    %c0_i32_1 = arith.constant 0 : i32
    return %c0_i32, %c0_i32_0 : i32, i32
  }
  func.func @transform_2(%arg0: i32) -> (i32, i32) {
    %c0_i32 = arith.constant 0 : i32
    %c0_i32_0 = arith.constant 0 : i32
    %c0_i32_1 = arith.constant 0 : i32
    return %c0_i32, %c0_i32_0 : i32, i32
  }
  func.func @transform_3(%arg0: i32) -> (i32, i32) {
    %c0_i32 = arith.constant 0 : i32
    %c0_i32_0 = arith.constant 0 : i32
    %c0_i32_1 = arith.constant 0 : i32
    return %c0_i32, %c0_i32_0 : i32, i32
  }
  func.func @transform_4(%arg0: i32) -> (i32, i32) {
    %c0_i32 = arith.constant 0 : i32
    %c0_i32_0 = arith.constant 0 : i32
    %c0_i32_1 = arith.constant 0 : i32
    return %c0_i32, %c0_i32_0 : i32, i32
  }
  func.func @transform_5(%arg0: i32) -> (i32, i32) {
    %c0_i32 = arith.constant 0 : i32
    %c0_i32_0 = arith.constant 0 : i32
    %c0_i32_1 = arith.constant 0 : i32
    return %c0_i32, %c0_i32_0 : i32, i32
  }
  func.func @transform_6(%arg0: i32) -> (i32, i32) {
    %c0_i32 = arith.constant 0 : i32
    %c0_i32_0 = arith.constant 0 : i32
    %c0_i32_1 = arith.constant 0 : i32
    return %c0_i32, %c0_i32_0 : i32, i32
  }
  func.func @transform_7(%arg0: i32) -> (i32, i32) {
    %c0_i32 = arith.constant 0 : i32
    %c0_i32_0 = arith.constant 0 : i32
    return %arg0, %c0_i32 : i32, i32
  }
}

</mosaic_0001>

<llo_original>
// kernel: fused_mlp.1
$region0: #{fused_mlp.1}
  #allocation0 [shape = 'u32[]', space=smem, size = 0x4, offset = 0x4, fixed_abs, tag = 'smem constant byte address 0x4 - core index']
  #allocation1 [shape = 'u32[72,128]{1,0:T(1,128)}', space=vmem, size = 0x9000, scoped, tag = 'internal scratch']
  %s0 = inlined_call_operand.hbm [shape: bf16[4,784], index: 0, kind: input, shape index: {}]
  %s1 = inlined_call_operand.hbm [shape: bf16[784,256], index: 1, kind: input, shape index: {}]
  %s2 = inlined_call_operand.hbm [shape: f32[1,256], index: 2, kind: input, shape index: {}]
  %s3 = inlined_call_operand.hbm [shape: bf16[256,128], index: 3, kind: input, shape index: {}]
  %s4 = inlined_call_operand.vmem [shape: f32[1,128], index: 4, kind: input, shape index: {}]
  %s5 = inlined_call_operand.hbm [shape: bf16[128,128], index: 5, kind: input, shape index: {}]
  %s6 = inlined_call_operand.vmem [shape: f32[1,128], index: 6, kind: input, shape index: {}]
  %s7 = inlined_call_operand.hbm [shape: bf16[4,128], index: 7, kind: output, shape index: {}]
  %s8 = sld [smem:[#allocation0]]
  $region58: #{fused_mlp.1} parent=0
    _
  %s10 = ssub.s32 1, %s8
  %s11 = scalar_select 0, %s10, %s8
  $region1: #{fused_mlp.1} parent=0
    #allocation2 [shape = 'u8[7168]{0}', space=vmem, size = 0x1c00, scoped, tag = 'input window, operand 0, single buffered']
    #allocation3 [shape = 's32[1]{0}', space=sflag, size = 0x4, scoped, tag = 'scoped memory for fused_mlp.1']
    #allocation4 [shape = 's32[1]{0}', space=sflag, size = 0x4, scoped, tag = 'scoped memory for fused_mlp.1']
    #allocation5 [shape = 'u8[401408]{0}', space=vmem, size = 0x62000, scoped, tag = 'input window, operand 1, single buffered']
    #allocation6 [shape = 's32[1]{0}', space=sflag, size = 0x4, scoped, tag = 'scoped memory for fused_mlp.1']
    #allocation7 [shape = 'u8[1024]{0}', space=vmem, size = 0x400, scoped, tag = 'input window, operand 2, single buffered']
    #allocation8 [shape = 'u8[65536]{0}', space=vmem, size = 0x10000, scoped, tag = 'input window, operand 3, single buffered']
    #allocation9 [shape = 's32[1]{0}', space=sflag, size = 0x4, scoped, tag = 'scoped memory for fused_mlp.1']
    #allocation10 [shape = 'u8[32768]{0}', space=vmem, size = 0x8000, scoped, tag = 'input window, operand 5, single buffered']
    #allocation11 [shape = 'u8[1024]{0}', space=vmem, size = 0x400, scoped, tag = 'output window, operand 0, single buffered']
    %12 = vsyncpa [#allocation3], 0
    %13 = vsyncpa [#allocation6], 0
    %14 = vsyncpa [#allocation9], 0
    %15 = vsyncpa [#allocation4], 0
    // Predicated region
    $region2: #{fused_mlp.1} parent=1 // pred_check
      _
    $region3: #{fused_mlp.1} parent=1 // pred_check_branch
      %17 = sbr.rel (0) target = $region5
    $region4: #{fused_mlp.1} parent=1 // pred_region
      %19 = vsyncadd [#allocation3], 0
      %s21 = sshll.u32 %s0, 4
      %s22 = int_to_ptr.hbm [resolvable:$true] %s21
      %s23 = sshll.u32 [#allocation2], 4
      %s24 = int_to_ptr.vmem [resolvable:$true] %s23
      %26 = dma.hbm_to_vmem [thread:$0]  %s22, 224, %s24, [#allocation3]
    $region5: #{fused_mlp.1} parent=1 // pred_fallthru
      _
    // Predicated region
    $region6: #{fused_mlp.1} parent=1 // pred_check
      _
    $region7: #{fused_mlp.1} parent=1 // pred_check_branch
      %28 = sbr.rel (0) target = $region9
    $region8: #{fused_mlp.1} parent=1 // pred_region
      %30 = vsyncadd [#allocation6], 0
      %s31 = sshll.u32 %s1, 4
      %s32 = int_to_ptr.hbm [resolvable:$true] %s31
      %s33 = sshll.u32 [#allocation5], 4
      %s34 = int_to_ptr.vmem [resolvable:$true] %s33
      %39 = dma.hbm_to_vmem [thread:$0]  %s32, 12544, %s34, [#allocation6], 128, 128, 8
    $region9: #{fused_mlp.1} parent=1 // pred_fallthru
      _
    // Predicated region
    $region10: #{fused_mlp.1} parent=1 // pred_check
      _
    $region11: #{fused_mlp.1} parent=1 // pred_check_branch
      %41 = sbr.rel (0) target = $region13
    $region12: #{fused_mlp.1} parent=1 // pred_region
      %43 = vsyncadd [#allocation6], 0
      %s45 = sshll.u32 %s2, 4
      %s46 = int_to_ptr.hbm [resolvable:$true] %s45
      %s47 = sshll.u32 [#allocation7], 4
      %s48 = int_to_ptr.vmem [resolvable:$true] %s47
      %50 = dma.hbm_to_vmem [thread:$0]  %s46, 32, %s48, [#allocation6]
    $region13: #{fused_mlp.1} parent=1 // pred_fallthru
      _
    // Predicated region
    $region14: #{fused_mlp.1} parent=1 // pred_check
      _
    $region15: #{fused_mlp.1} parent=1 // pred_check_branch
      %52 = sbr.rel (0) target = $region17
    $region16: #{fused_mlp.1} parent=1 // pred_region
      %54 = vsyncadd [#allocation9], 0
      %s55 = sshll.u32 %s3, 4
      %s56 = int_to_ptr.hbm [resolvable:$true] %s55
      %s57 = sshll.u32 [#allocation8], 4
      %s58 = int_to_ptr.vmem [resolvable:$true] %s57
      %63 = dma.hbm_to_vmem [thread:$0]  %s56, 2048, %s58, [#allocation9], 64, 64, 4
    $region17: #{fused_mlp.1} parent=1 // pred_fallthru
      _
    // Predicated region
    $region18: #{fused_mlp.1} parent=1 // pred_check
      _
    $region19: #{fused_mlp.1} parent=1 // pred_check_branch
      %65 = sbr.rel (0) target = $region21
    $region20: #{fused_mlp.1} parent=1 // pred_region
      _
    $region21: #{fused_mlp.1} parent=1 // pred_fallthru
      _
    // Predicated region
    $region22: #{fused_mlp.1} parent=1 // pred_check
      _
    $region23: #{fused_mlp.1} parent=1 // pred_check_branch
      %67 = sbr.rel (0) target = $region25
    $region24: #{fused_mlp.1} parent=1 // pred_region
      %69 = vsyncadd [#allocation9], 0
      %s70 = sshll.u32 %s5, 4
      %s71 = int_to_ptr.hbm [resolvable:$true] %s70
      %s72 = sshll.u32 [#allocation10], 4
      %s73 = int_to_ptr.vmem [resolvable:$true] %s72
      %78 = dma.hbm_to_vmem [thread:$0]  %s71, 1024, %s73, [#allocation9], 64, 64, 4
    $region25: #{fused_mlp.1} parent=1 // pred_fallthru
      _
    // Predicated region
    $region26: #{fused_mlp.1} parent=1 // pred_check
      _
    $region27: #{fused_mlp.1} parent=1 // pred_check_branch
      %80 = sbr.rel (0) target = $region29
    $region28: #{fused_mlp.1} parent=1 // pred_region
      _
    $region29: #{fused_mlp.1} parent=1 // pred_fallthru
      _
    // Predicated region
    $region30: #{fused_mlp.1} parent=1 // pred_check
      _
    $region31: #{fused_mlp.1} parent=1 // pred_check_branch
      %82 = sbr.rel (0) target = $region33
    $region32: #{fused_mlp.1} parent=1 // pred_region
      %84 = dma.done [#allocation3], 224
    $region33: #{fused_mlp.1} parent=1 // pred_fallthru
      _
    // Predicated region
    $region34: #{fused_mlp.1} parent=1 // pred_check
      _
    $region35: #{fused_mlp.1} parent=1 // pred_check_branch
      %86 = sbr.rel (0) target = $region37
    $region36: #{fused_mlp.1} parent=1 // pred_region
      %88 = dma.done [#allocation6], 12544
    $region37: #{fused_mlp.1} parent=1 // pred_fallthru
      _
    // Predicated region
    $region38: #{fused_mlp.1} parent=1 // pred_check
      _
    $region39: #{fused_mlp.1} parent=1 // pred_check_branch
      %90 = sbr.rel (0) target = $region41
    $region40: #{fused_mlp.1} parent=1 // pred_region
      %92 = dma.done [#allocation6], 32
    $region41: #{fused_mlp.1} parent=1 // pred_fallthru
      _
    // Predicated region
    $region42: #{fused_mlp.1} parent=1 // pred_check
      _
    $region43: #{fused_mlp.1} parent=1 // pred_check_branch
      %94 = sbr.rel (0) target = $region45
    $region44: #{fused_mlp.1} parent=1 // pred_region
      %96 = dma.done [#allocation9], 2048
    $region45: #{fused_mlp.1} parent=1 // pred_fallthru
      _
    // Predicated region
    $region46: #{fused_mlp.1} parent=1 // pred_check
      _
    $region47: #{fused_mlp.1} parent=1 // pred_check_branch
      %98 = sbr.rel (0) target = $region49
    $region48: #{fused_mlp.1} parent=1 // pred_region
      %100 = dma.done [#allocation9], 1024
    $region49: #{fused_mlp.1} parent=1 // pred_fallthru
      _
    %v102 = vld [vmem:[#allocation2] sm:$0xff]
    %v103 = vld [vmem:[#allocation2 + $0x8] sm:$0x3f]
    %v104 = vld [vmem:[#allocation5] sm:$0xff]
    %v105 = vld [vmem:[#allocation5 + $0x8] sm:$0xff]
    %v106 = vld [vmem:[#allocation5 + $0x10] sm:$0xff]
    %v107 = vld [vmem:[#allocation5 + $0x18] sm:$0xff]
    %v108 = vld [vmem:[#allocation5 + $0x20] sm:$0xff]
    %v109 = vld [vmem:[#allocation5 + $0x28] sm:$0xff]
    %v110 = vld [vmem:[#allocation5 + $0x30] sm:$0xff]
    %v111 = vld [vmem:[#allocation5 + $0x38] sm:$0xff]
    %v112 = vld [vmem:[#allocation5 + $0x40] sm:$0xff]
    %v113 = vld [vmem:[#allocation5 + $0x48] sm:$0xff]
    %v114 = vld [vmem:[#allocation5 + $0x50] sm:$0xff]
    %v115 = vld [vmem:[#allocation5 + $0x58] sm:$0xff]
    %v116 = vld [vmem:[#allocation5 + $0x60] sm:$0xff]
    %v117 = vld [vmem:[#allocation5 + $0x68] sm:$0xff]
    %v118 = vld [vmem:[#allocation5 + $0x70] sm:$0xff]
    %v119 = vld [vmem:[#allocation5 + $0x78] sm:$0xff]
    %v120 = vld [vmem:[#allocation5 + $0x80] sm:$0xff]
    %v121 = vld [vmem:[#allocation5 + $0x88] sm:$0xff]
    %v122 = vld [vmem:[#allocation5 + $0x90] sm:$0xff]
    %v123 = vld [vmem:[#allocation5 + $0x98] sm:$0xff]
    %v124 = vld [vmem:[#allocation5 + $0xa0] sm:$0xff]
    %v125 = vld [vmem:[#allocation5 + $0xa8] sm:$0xff]
    %v126 = vld [vmem:[#allocation5 + $0xb0] sm:$0xff]
    %v127 = vld [vmem:[#allocation5 + $0xb8] sm:$0xff]
    %v128 = vld [vmem:[#allocation5 + $0xc0] sm:$0xff]
    %v129 = vld [vmem:[#allocation5 + $0xc8] sm:$0xff]
    %v130 = vld [vmem:[#allocation5 + $0xd0] sm:$0xff]
    %v131 = vld [vmem:[#allocation5 + $0xd8] sm:$0xff]
    %v132 = vld [vmem:[#allocation5 + $0xe0] sm:$0xff]
    %v133 = vld [vmem:[#allocation5 + $0xe8] sm:$0xff]
    %v134 = vld [vmem:[#allocation5 + $0xf0] sm:$0xff]
    %v135 = vld [vmem:[#allocation5 + $0xf8] sm:$0xff]
    %v136 = vld [vmem:[#allocation5 + $0x100] sm:$0xff]
    %v137 = vld [vmem:[#allocation5 + $0x108] sm:$0xff]
    %v138 = vld [vmem:[#allocation5 + $0x110] sm:$0xff]
    %v139 = vld [vmem:[#allocation5 + $0x118] sm:$0xff]
    %v140 = vld [vmem:[#allocation5 + $0x120] sm:$0xff]
    %v141 = vld [vmem:[#allocation5 + $0x128] sm:$0xff]
    %v142 = vld [vmem:[#allocation5 + $0x130] sm:$0xff]
    %v143 = vld [vmem:[#allocation5 + $0x138] sm:$0xff]
    %v144 = vld [vmem:[#allocation5 + $0x140] sm:$0xff]
    %v145 = vld [vmem:[#allocation5 + $0x148] sm:$0xff]
    %v146 = vld [vmem:[#allocation5 + $0x150] sm:$0xff]
    %v147 = vld [vmem:[#allocation5 + $0x158] sm:$0xff]
    %v148 = vld [vmem:[#allocation5 + $0x160] sm:$0xff]
    %v149 = vld [vmem:[#allocation5 + $0x168] sm:$0xff]
    %v150 = vld [vmem:[#allocation5 + $0x170] sm:$0xff]
    %v151 = vld [vmem:[#allocation5 + $0x178] sm:$0xff]
    %v152 = vld [vmem:[#allocation5 + $0x180] sm:$0xff]
    %v153 = vld [vmem:[#allocation5 + $0x188] sm:$0xff]
    %v154 = vld [vmem:[#allocation5 + $0x190] sm:$0xff]
    %v155 = vld [vmem:[#allocation5 + $0x198] sm:$0xff]
    %v156 = vld [vmem:[#allocation5 + $0x1a0] sm:$0xff]
    %v157 = vld [vmem:[#allocation5 + $0x1a8] sm:$0xff]
    %v158 = vld [vmem:[#allocation5 + $0x1b0] sm:$0xff]
    %v159 = vld [vmem:[#allocation5 + $0x1b8] sm:$0xff]
    %v160 = vld [vmem:[#allocation5 + $0x1c0] sm:$0xff]
    %v161 = vld [vmem:[#allocation5 + $0x1c8] sm:$0xff]
    %v162 = vld [vmem:[#allocation5 + $0x1d0] sm:$0xff]
    %v163 = vld [vmem:[#allocation5 + $0x1d8] sm:$0xff]
    %v164 = vld [vmem:[#allocation5 + $0x1e0] sm:$0xff]
    %v165 = vld [vmem:[#allocation5 + $0x1e8] sm:$0xff]
    %v166 = vld [vmem:[#allocation5 + $0x1f0] sm:$0xff]
    %v167 = vld [vmem:[#allocation5 + $0x1f8] sm:$0xff]
    %v168 = vld [vmem:[#allocation5 + $0x200] sm:$0xff]
    %v169 = vld [vmem:[#allocation5 + $0x208] sm:$0xff]
    %v170 = vld [vmem:[#allocation5 + $0x210] sm:$0xff]
    %v171 = vld [vmem:[#allocation5 + $0x218] sm:$0xff]
    %v172 = vld [vmem:[#allocation5 + $0x220] sm:$0xff]
    %v173 = vld [vmem:[#allocation5 + $0x228] sm:$0xff]
    %v174 = vld [vmem:[#allocation5 + $0x230] sm:$0xff]
    %v175 = vld [vmem:[#allocation5 + $0x238] sm:$0xff]
    %v176 = vld [vmem:[#allocation5 + $0x240] sm:$0xff]
    %v177 = vld [vmem:[#allocation5 + $0x248] sm:$0xff]
    %v178 = vld [vmem:[#allocation5 + $0x250] sm:$0xff]
    %v179 = vld [vmem:[#allocation5 + $0x258] sm:$0xff]
    %v180 = vld [vmem:[#allocation5 + $0x260] sm:$0xff]
    %v181 = vld [vmem:[#allocation5 + $0x268] sm:$0xff]
    %v182 = vld [vmem:[#allocation5 + $0x270] sm:$0xff]
    %v183 = vld [vmem:[#allocation5 + $0x278] sm:$0xff]
    %v184 = vld [vmem:[#allocation5 + $0x280] sm:$0xff]
    %v185 = vld [vmem:[#allocation5 + $0x288] sm:$0xff]
    %v186 = vld [vmem:[#allocation5 + $0x290] sm:$0xff]
    %v187 = vld [vmem:[#allocation5 + $0x298] sm:$0xff]
    %v188 = vld [vmem:[#allocation5 + $0x2a0] sm:$0xff]
    %v189 = vld [vmem:[#allocation5 + $0x2a8] sm:$0xff]
    %v190 = vld [vmem:[#allocation5 + $0x2b0] sm:$0xff]
    %v191 = vld [vmem:[#allocation5 + $0x2b8] sm:$0xff]
    %v192 = vld [vmem:[#allocation5 + $0x2c0] sm:$0xff]
    %v193 = vld [vmem:[#allocation5 + $0x2c8] sm:$0xff]
    %v194 = vld [vmem:[#allocation5 + $0x2d0] sm:$0xff]
    %v195 = vld [vmem:[#allocation5 + $0x2d8] sm:$0xff]
    %v196 = vld [vmem:[#allocation5 + $0x2e0] sm:$0xff]
    %v197 = vld [vmem:[#allocation5 + $0x2e8] sm:$0xff]
    %v198 = vld [vmem:[#allocation5 + $0x2f0] sm:$0xff]
    %v199 = vld [vmem:[#allocation5 + $0x2f8] sm:$0xff]
    %v200 = vld [vmem:[#allocation5 + $0x300] sm:$0xff]
    %v201 = vld [vmem:[#allocation5 + $0x308] sm:$0xff]
    %v202 = vld [vmem:[#allocation7] sm:$0x3]
    %v204 = vperm.slane %v202, 0
    %v205 = vperm.slane %v202, 1
    %209 = vst [vmem:[#allocation1] ss:$4 sm:$0xff] %v102
    %s211 = scalar_lea.vmem [#allocation1], 32
    %212 = vst [vmem:[%s211] ss:$4 sm:$0xff] %v103
    %v213 = vld.sshfl [vmem:[#allocation1] sm:$0xff pattern:$0x73625140]
    %v214 = vld.sshfl [vmem:[#allocation1 + $0x8] sm:$0xff pattern:$0x73625140]
    %v215 = vld.sshfl [vmem:[#allocation1 + $0x10] sm:$0xff pattern:$0x73625140]
    %v216 = vld.sshfl [vmem:[#allocation1 + $0x18] sm:$0xff pattern:$0x73625140]
    %v217 = vld.sshfl [vmem:[#allocation1 + $0x20] sm:$0xff pattern:$0x73625140]
    %v218 = vld.sshfl [vmem:[#allocation1 + $0x28] sm:$0xff pattern:$0x73625140]
    %v219 = vld.sshfl [vmem:[#allocation1 + $0x30] sm:$0xff pattern:$0x73625140]
    %v324 = vunpack.c.l.b16 %v104
    %v325 = vunpack.c.h.b16 %v104
    %v326 = vunpack.c.l.b16 %v105
    %v327 = vunpack.c.h.b16 %v105
    %v328 = vunpack.c.l.b16 %v106
    %v329 = vunpack.c.h.b16 %v106
    %v330 = vunpack.c.l.b16 %v107
    %v331 = vunpack.c.h.b16 %v107
    %v332 = vunpack.c.l.b16 %v108
    %v333 = vunpack.c.h.b16 %v108
    %v334 = vunpack.c.l.b16 %v109
    %v335 = vunpack.c.h.b16 %v109
    %v336 = vunpack.c.l.b16 %v110
    %v337 = vunpack.c.h.b16 %v110
    %v338 = vunpack.c.l.b16 %v111
    %v339 = vunpack.c.h.b16 %v111
    %v340 = vunpack.c.l.b16 %v112
    %v341 = vunpack.c.h.b16 %v112
    %v342 = vunpack.c.l.b16 %v113
    %v343 = vunpack.c.h.b16 %v113
    %v344 = vunpack.c.l.b16 %v114
    %v345 = vunpack.c.h.b16 %v114
    %v346 = vunpack.c.l.b16 %v115
    %v347 = vunpack.c.h.b16 %v115
    %v348 = vunpack.c.l.b16 %v116
    %v349 = vunpack.c.h.b16 %v116
    %v350 = vunpack.c.l.b16 %v117
    %v351 = vunpack.c.h.b16 %v117
    %v352 = vunpack.c.l.b16 %v118
    %v353 = vunpack.c.h.b16 %v118
    %v354 = vunpack.c.l.b16 %v119
    %v355 = vunpack.c.h.b16 %v119
    %v356 = vunpack.c.l.b16 %v120
    %v357 = vunpack.c.h.b16 %v120
    %v358 = vunpack.c.l.b16 %v121
    %v359 = vunpack.c.h.b16 %v121
    %v360 = vunpack.c.l.b16 %v122
    %v361 = vunpack.c.h.b16 %v122
    %v362 = vunpack.c.l.b16 %v123
    %v363 = vunpack.c.h.b16 %v123
    %v364 = vunpack.c.l.b16 %v124
    %v365 = vunpack.c.h.b16 %v124
    %v366 = vunpack.c.l.b16 %v125
    %v367 = vunpack.c.h.b16 %v125
    %v368 = vunpack.c.l.b16 %v126
    %v369 = vunpack.c.h.b16 %v126
    %v370 = vunpack.c.l.b16 %v127
    %v371 = vunpack.c.h.b16 %v127
    %v372 = vunpack.c.l.b16 %v128
    %v373 = vunpack.c.h.b16 %v128
    %v374 = vunpack.c.l.b16 %v129
    %v375 = vunpack.c.h.b16 %v129
    %v376 = vunpack.c.l.b16 %v130
    %v377 = vunpack.c.h.b16 %v130
    %v378 = vunpack.c.l.b16 %v131
    %v379 = vunpack.c.h.b16 %v131
    %v380 = vunpack.c.l.b16 %v132
    %v381 = vunpack.c.h.b16 %v132
    %v382 = vunpack.c.l.b16 %v133
    %v383 = vunpack.c.h.b16 %v133
    %v384 = vunpack.c.l.b16 %v134
    %v385 = vunpack.c.h.b16 %v134
    %v386 = vunpack.c.l.b16 %v135
    %v387 = vunpack.c.h.b16 %v135
    %v388 = vunpack.c.l.b16 %v136
    %v389 = vunpack.c.h.b16 %v136
    %v390 = vunpack.c.l.b16 %v137
    %v391 = vunpack.c.h.b16 %v137
    %v392 = vunpack.c.l.b16 %v138
    %v393 = vunpack.c.h.b16 %v138
    %v394 = vunpack.c.l.b16 %v139
    %v395 = vunpack.c.h.b16 %v139
    %v396 = vunpack.c.l.b16 %v140
    %v397 = vunpack.c.h.b16 %v140
    %v398 = vunpack.c.l.b16 %v141
    %v399 = vunpack.c.h.b16 %v141
    %v400 = vunpack.c.l.b16 %v142
    %v401 = vunpack.c.h.b16 %v142
    %v402 = vunpack.c.l.b16 %v143
    %v403 = vunpack.c.h.b16 %v143
    %v404 = vunpack.c.l.b16 %v144
    %v405 = vunpack.c.h.b16 %v144
    %v406 = vunpack.c.l.b16 %v145
    %v407 = vunpack.c.h.b16 %v145
    %v408 = vunpack.c.l.b16 %v146
    %v409 = vunpack.c.h.b16 %v146
    %v410 = vunpack.c.l.b16 %v147
    %v411 = vunpack.c.h.b16 %v147
    %v412 = vunpack.c.l.b16 %v148
    %v413 = vunpack.c.h.b16 %v148
    %v414 = vunpack.c.l.b16 %v149
    %v415 = vunpack.c.h.b16 %v149
    %v416 = vunpack.c.l.b16 %v150
    %v417 = vunpack.c.h.b16 %v150
    %v418 = vunpack.c.l.b16 %v151
    %v419 = vunpack.c.h.b16 %v151
    %v420 = vunpack.c.l.b16 %v152
    %v421 = vunpack.c.h.b16 %v152
    %v422 = vunpack.c.l.b16 %v153
    %v423 = vunpack.c.h.b16 %v153
    %v424 = vunpack.c.l.b16 %v154
    %v425 = vunpack.c.h.b16 %v154
    %v426 = vunpack.c.l.b16 %v155
    %v427 = vunpack.c.h.b16 %v155
    %v428 = vunpack.c.l.b16 %v156
    %v429 = vunpack.c.h.b16 %v156
    %v430 = vunpack.c.l.b16 %v157
    %v431 = vunpack.c.h.b16 %v157
    %v432 = vunpack.c.l.b16 %v158
    %v433 = vunpack.c.h.b16 %v158
    %v434 = vunpack.c.l.b16 %v159
    %v435 = vunpack.c.h.b16 %v159
    %v436 = vunpack.c.l.b16 %v160
    %v437 = vunpack.c.h.b16 %v160
    %v438 = vunpack.c.l.b16 %v161
    %v439 = vunpack.c.h.b16 %v161
    %v440 = vunpack.c.l.b16 %v162
    %v441 = vunpack.c.h.b16 %v162
    %v442 = vunpack.c.l.b16 %v163
    %v443 = vunpack.c.h.b16 %v163
    %v444 = vunpack.c.l.b16 %v164
    %v445 = vunpack.c.h.b16 %v164
    %v446 = vunpack.c.l.b16 %v165
    %v447 = vunpack.c.h.b16 %v165
    %v448 = vunpack.c.l.b16 %v166
    %v449 = vunpack.c.h.b16 %v166
    %v450 = vunpack.c.l.b16 %v167
    %v451 = vunpack.c.h.b16 %v167
    %v452 = vunpack.c.l.b16 %v168
    %v453 = vunpack.c.h.b16 %v168
    %v454 = vunpack.c.l.b16 %v169
    %v455 = vunpack.c.h.b16 %v169
    %v456 = vunpack.c.l.b16 %v170
    %v457 = vunpack.c.h.b16 %v170
    %v458 = vunpack.c.l.b16 %v171
    %v459 = vunpack.c.h.b16 %v171
    %v460 = vunpack.c.l.b16 %v172
    %v461 = vunpack.c.h.b16 %v172
    %v462 = vunpack.c.l.b16 %v173
    %v463 = vunpack.c.h.b16 %v173
    %v464 = vunpack.c.l.b16 %v174
    %v465 = vunpack.c.h.b16 %v174
    %v466 = vunpack.c.l.b16 %v175
    %v467 = vunpack.c.h.b16 %v175
    %v468 = vunpack.c.l.b16 %v176
    %v469 = vunpack.c.h.b16 %v176
    %v470 = vunpack.c.l.b16 %v177
    %v471 = vunpack.c.h.b16 %v177
    %v472 = vunpack.c.l.b16 %v178
    %v473 = vunpack.c.h.b16 %v178
    %v474 = vunpack.c.l.b16 %v179
    %v475 = vunpack.c.h.b16 %v179
    %v476 = vunpack.c.l.b16 %v180
    %v477 = vunpack.c.h.b16 %v180
    %v478 = vunpack.c.l.b16 %v181
    %v479 = vunpack.c.h.b16 %v181
    %v480 = vunpack.c.l.b16 %v182
    %v481 = vunpack.c.h.b16 %v182
    %v482 = vunpack.c.l.b16 %v183
    %v483 = vunpack.c.h.b16 %v183
    %v484 = vunpack.c.l.b16 %v184
    %v485 = vunpack.c.h.b16 %v184
    %v486 = vunpack.c.l.b16 %v185
    %v487 = vunpack.c.h.b16 %v185
    %v488 = vunpack.c.l.b16 %v186
    %v489 = vunpack.c.h.b16 %v186
    %v490 = vunpack.c.l.b16 %v187
    %v491 = vunpack.c.h.b16 %v187
    %v492 = vunpack.c.l.b16 %v188
    %v493 = vunpack.c.h.b16 %v188
    %v494 = vunpack.c.l.b16 %v189
    %v495 = vunpack.c.h.b16 %v189
    %v496 = vunpack.c.l.b16 %v190
    %v497 = vunpack.c.h.b16 %v190
    %v498 = vunpack.c.l.b16 %v191
    %v499 = vunpack.c.h.b16 %v191
    %v500 = vunpack.c.l.b16 %v192
    %v501 = vunpack.c.h.b16 %v192
    %v502 = vunpack.c.l.b16 %v193
    %v503 = vunpack.c.h.b16 %v193
    %v504 = vunpack.c.l.b16 %v194
    %v505 = vunpack.c.h.b16 %v194
    %v506 = vunpack.c.l.b16 %v195
    %v507 = vunpack.c.h.b16 %v195
    %v508 = vunpack.c.l.b16 %v196
    %v509 = vunpack.c.h.b16 %v196
    %v510 = vunpack.c.l.b16 %v197
    %v511 = vunpack.c.h.b16 %v197
    %v512 = vunpack.c.l.b16 %v198
    %v513 = vunpack.c.h.b16 %v198
    %v514 = vunpack.c.l.b16 %v199
    %v515 = vunpack.c.h.b16 %v199
    %v516 = vunpack.c.l.b16 %v200
    %v517 = vunpack.c.h.b16 %v200
    %v518 = vunpack.c.l.b16 %v201
    %v519 = vunpack.c.h.b16 %v201
    %v520 = vpack.c.b16 %v326, %v324
    %v521 = vpack.c.b16 %v327, %v325
    %v522 = vpack.c.b16 %v330, %v328
    %v523 = vpack.c.b16 %v331, %v329
    %v524 = vpack.c.b16 %v334, %v332
    %v525 = vpack.c.b16 %v335, %v333
    %v526 = vpack.c.b16 %v338, %v336
    %v527 = vpack.c.b16 %v339, %v337
    %v528 = vpack.c.b16 %v342, %v340
    %v529 = vpack.c.b16 %v343, %v341
    %v530 = vpack.c.b16 %v346, %v344
    %v531 = vpack.c.b16 %v347, %v345
    %v532 = vpack.c.b16 %v350, %v348
    %v533 = vpack.c.b16 %v351, %v349
    %v534 = vpack.c.b16 %v354, %v352
    %v535 = vpack.c.b16 %v355, %v353
    %v536 = vpack.c.b16 %v358, %v356
    %v537 = vpack.c.b16 %v359, %v357
    %v538 = vpack.c.b16 %v362, %v360
    %v539 = vpack.c.b16 %v363, %v361
    %v540 = vpack.c.b16 %v366, %v364
    %v541 = vpack.c.b16 %v367, %v365
    %v542 = vpack.c.b16 %v370, %v368
    %v543 = vpack.c.b16 %v371, %v369
    %v544 = vpack.c.b16 %v374, %v372
    %v545 = vpack.c.b16 %v375, %v373
    %v546 = vpack.c.b16 %v378, %v376
    %v547 = vpack.c.b16 %v379, %v377
    %v548 = vpack.c.b16 %v382, %v380
    %v549 = vpack.c.b16 %v383, %v381
    %v550 = vpack.c.b16 %v386, %v384
    %v551 = vpack.c.b16 %v387, %v385
    %v552 = vpack.c.b16 %v390, %v388
    %v553 = vpack.c.b16 %v391, %v389
    %v554 = vpack.c.b16 %v394, %v392
    %v555 = vpack.c.b16 %v395, %v393
    %v556 = vpack.c.b16 %v398, %v396
    %v557 = vpack.c.b16 %v399, %v397
    %v558 = vpack.c.b16 %v402, %v400
    %v559 = vpack.c.b16 %v403, %v401
    %v560 = vpack.c.b16 %v406, %v404
    %v561 = vpack.c.b16 %v407, %v405
    %v562 = vpack.c.b16 %v410, %v408
    %v563 = vpack.c.b16 %v411, %v409
    %v564 = vpack.c.b16 %v414, %v412
    %v565 = vpack.c.b16 %v415, %v413
    %v566 = vpack.c.b16 %v418, %v416
    %v567 = vpack.c.b16 %v419, %v417
    %v568 = vpack.c.b16 %v422, %v420
    %v569 = vpack.c.b16 %v423, %v421
    %v570 = vpack.c.b16 %v426, %v424
    %v571 = vpack.c.b16 %v427, %v425
    %v572 = vpack.c.b16 %v430, %v428
    %v573 = vpack.c.b16 %v431, %v429
    %v574 = vpack.c.b16 %v434, %v432
    %v575 = vpack.c.b16 %v435, %v433
    %v576 = vpack.c.b16 %v438, %v436
    %v577 = vpack.c.b16 %v439, %v437
    %v578 = vpack.c.b16 %v442, %v440
    %v579 = vpack.c.b16 %v443, %v441
    %v580 = vpack.c.b16 %v446, %v444
    %v581 = vpack.c.b16 %v447, %v445
    %v582 = vpack.c.b16 %v450, %v448
    %v583 = vpack.c.b16 %v451, %v449
    %v584 = vpack.c.b16 %v454, %v452
    %v585 = vpack.c.b16 %v455, %v453
    %v586 = vpack.c.b16 %v458, %v456
    %v587 = vpack.c.b16 %v459, %v457
    %v588 = vpack.c.b16 %v462, %v460
    %v589 = vpack.c.b16 %v463, %v461
    %v590 = vpack.c.b16 %v466, %v464
    %v591 = vpack.c.b16 %v467, %v465
    %v592 = vpack.c.b16 %v470, %v468
    %v593 = vpack.c.b16 %v471, %v469
    %v594 = vpack.c.b16 %v474, %v472
    %v595 = vpack.c.b16 %v475, %v473
    %v596 = vpack.c.b16 %v478, %v476
    %v597 = vpack.c.b16 %v479, %v477
    %v598 = vpack.c.b16 %v482, %v480
    %v599 = vpack.c.b16 %v483, %v481
    %v600 = vpack.c.b16 %v486, %v484
    %v601 = vpack.c.b16 %v487, %v485
    %v602 = vpack.c.b16 %v490, %v488
    %v603 = vpack.c.b16 %v491, %v489
    %v604 = vpack.c.b16 %v494, %v492
    %v605 = vpack.c.b16 %v495, %v493
    %v606 = vpack.c.b16 %v498, %v496
    %v607 = vpack.c.b16 %v499, %v497
    %v608 = vpack.c.b16 %v502, %v500
    %v609 = vpack.c.b16 %v503, %v501
    %v610 = vpack.c.b16 %v506, %v504
    %v611 = vpack.c.b16 %v507, %v505
    %v612 = vpack.c.b16 %v510, %v508
    %v613 = vpack.c.b16 %v511, %v509
    %v614 = vpack.c.b16 %v514, %v512
    %v615 = vpack.c.b16 %v515, %v513
    %v616 = vpack.c.b16 %v518, %v516
    %v617 = vpack.c.b16 %v519, %v517
    %vm716 = vcmask 130048
    %v717 = vsel %vm716, %v219, 0
    %719 = vmatpush.bf16.msra.mxu0 %v534
    %720 = vmatpush.bf16.msra.mxu0 %v532
    %721 = vmatpush.bf16.msra.mxu0 %v530
    %722 = vmatpush.bf16.msra.mxu0 %v528
    %723 = vmatpush.bf16.msra.mxu0 %v526
    %724 = vmatpush.bf16.msra.mxu0 %v524
    %725 = vmatpush.bf16.msra.mxu0 %v522
    %726 = vmatpush.bf16.msra.mxu0 %v520
    %727 = vmatmul.bf16.gmra.mxu0 %v213
    %v728 = vpop.f32.mrf.mxu0
    %v729 = vadd.f32 %v204, %v728
    %v730 = vpop.f32.mrf.mxu0
    %731 = vdwg.mxu0
    %732 = vmatpush.bf16.msra.mxu0 %v550
    %733 = vmatpush.bf16.msra.mxu0 %v548
    %734 = vmatpush.bf16.msra.mxu0 %v546
    %735 = vmatpush.bf16.msra.mxu0 %v544
    %736 = vmatpush.bf16.msra.mxu0 %v542
    %737 = vmatpush.bf16.msra.mxu0 %v540
    %738 = vmatpush.bf16.msra.mxu0 %v538
    %739 = vmatpush.bf16.msra.mxu0 %v536
    %740 = vmatmul.bf16.gmra.mxu0 %v214
    %v741 = vpop.f32.mrf.mxu0
    %v742 = vadd.f32 %v729, %v741
    %v743 = vpop.f32.mrf.mxu0
    %744 = vdwg.mxu0
    %745 = vmatpush.bf16.msra.mxu0 %v566
    %746 = vmatpush.bf16.msra.mxu0 %v564
    %747 = vmatpush.bf16.msra.mxu0 %v562
    %748 = vmatpush.bf16.msra.mxu0 %v560
    %749 = vmatpush.bf16.msra.mxu0 %v558
    %750 = vmatpush.bf16.msra.mxu0 %v556
    %751 = vmatpush.bf16.msra.mxu0 %v554
    %752 = vmatpush.bf16.msra.mxu0 %v552
    %753 = vmatmul.bf16.gmra.mxu0 %v215
    %v754 = vpop.f32.mrf.mxu0
    %v755 = vadd.f32 %v742, %v754
    %v756 = vpop.f32.mrf.mxu0
    %757 = vdwg.mxu0
    %758 = vmatpush.bf16.msra.mxu0 %v582
    %759 = vmatpush.bf16.msra.mxu0 %v580
    %760 = vmatpush.bf16.msra.mxu0 %v578
    %761 = vmatpush.bf16.msra.mxu0 %v576
    %762 = vmatpush.bf16.msra.mxu0 %v574
    %763 = vmatpush.bf16.msra.mxu0 %v572
    %764 = vmatpush.bf16.msra.mxu0 %v570
    %765 = vmatpush.bf16.msra.mxu0 %v568
    %766 = vmatmul.bf16.gmra.mxu0 %v216
    %v767 = vpop.f32.mrf.mxu0
    %v768 = vadd.f32 %v755, %v767
    %v769 = vpop.f32.mrf.mxu0
    %770 = vdwg.mxu0
    %771 = vmatpush.bf16.msra.mxu0 %v598
    %772 = vmatpush.bf16.msra.mxu0 %v596
    %773 = vmatpush.bf16.msra.mxu0 %v594
    %774 = vmatpush.bf16.msra.mxu0 %v592
    %775 = vmatpush.bf16.msra.mxu0 %v590
    %776 = vmatpush.bf16.msra.mxu0 %v588
    %777 = vmatpush.bf16.msra.mxu0 %v586
    %778 = vmatpush.bf16.msra.mxu0 %v584
    %779 = vmatmul.bf16.gmra.mxu0 %v217
    %v780 = vpop.f32.mrf.mxu0
    %v781 = vadd.f32 %v768, %v780
    %v782 = vpop.f32.mrf.mxu0
    %783 = vdwg.mxu0
    %784 = vmatpush.bf16.msra.mxu0 %v614
    %785 = vmatpush.bf16.msra.mxu0 %v612
    %786 = vmatpush.bf16.msra.mxu0 %v610
    %787 = vmatpush.bf16.msra.mxu0 %v608
    %788 = vmatpush.bf16.msra.mxu0 %v606
    %789 = vmatpush.bf16.msra.mxu0 %v604
    %790 = vmatpush.bf16.msra.mxu0 %v602
    %791 = vmatpush.bf16.msra.mxu0 %v600
    %792 = vmatmul.bf16.gmra.mxu0 %v218
    %v793 = vpop.f32.mrf.mxu0
    %v794 = vadd.f32 %v781, %v793
    %v795 = vpop.f32.mrf.mxu0
    %796 = vdwg.mxu0
    %797 = vmatpush.bf16.msra.mxu0 0
    %798 = vmatpush.bf16.msra.mxu0 0
    %799 = vmatpush.bf16.msra.mxu0 0
    %800 = vmatpush.bf16.msra.mxu0 0
    %801 = vmatpush.bf16.msra.mxu0 0
    %802 = vmatpush.bf16.msra.mxu0 0
    %803 = vmatpush.bf16.msra.mxu0 0
    %804 = vmatpush.bf16.msra.mxu0 %v616
    %805 = vmatmul.bf16.gmra.mxu0 %v717
    %v806 = vpop.f32.mrf.mxu0
    %v807 = vadd.f32 %v794, %v806
    %v808 = vpop.f32.mrf.mxu0
    %809 = vdwg.mxu0
    %810 = vmatpush.bf16.msra.mxu0 %v535
    %811 = vmatpush.bf16.msra.mxu0 %v533
    %812 = vmatpush.bf16.msra.mxu0 %v531
    %813 = vmatpush.bf16.msra.mxu0 %v529
    %814 = vmatpush.bf16.msra.mxu0 %v527
    %815 = vmatpush.bf16.msra.mxu0 %v525
    %816 = vmatpush.bf16.msra.mxu0 %v523
    %817 = vmatpush.bf16.msra.mxu0 %v521
    %818 = vmatmul.bf16.gmra.mxu0 %v213
    %v819 = vpop.f32.mrf.mxu0
    %v820 = vadd.f32 %v205, %v819
    %v821 = vpop.f32.mrf.mxu0
    %822 = vdwg.mxu0
    %823 = vmatpush.bf16.msra.mxu0 %v551
    %824 = vmatpush.bf16.msra.mxu0 %v549
    %825 = vmatpush.bf16.msra.mxu0 %v547
    %826 = vmatpush.bf16.msra.mxu0 %v545
    %827 = vmatpush.bf16.msra.mxu0 %v543
    %828 = vmatpush.bf16.msra.mxu0 %v541
    %829 = vmatpush.bf16.msra.mxu0 %v539
    %830 = vmatpush.bf16.msra.mxu0 %v537
    %831 = vmatmul.bf16.gmra.mxu0 %v214
    %v832 = vpop.f32.mrf.mxu0
    %v833 = vadd.f32 %v820, %v832
    %v834 = vpop.f32.mrf.mxu0
    %835 = vdwg.mxu0
    %836 = vmatpush.bf16.msra.mxu0 %v567
    %837 = vmatpush.bf16.msra.mxu0 %v565
    %838 = vmatpush.bf16.msra.mxu0 %v563
    %839 = vmatpush.bf16.msra.mxu0 %v561
    %840 = vmatpush.bf16.msra.mxu0 %v559
    %841 = vmatpush.bf16.msra.mxu0 %v557
    %842 = vmatpush.bf16.msra.mxu0 %v555
    %843 = vmatpush.bf16.msra.mxu0 %v553
    %844 = vmatmul.bf16.gmra.mxu0 %v215
    %v845 = vpop.f32.mrf.mxu0
    %v846 = vadd.f32 %v833, %v845
    %v847 = vpop.f32.mrf.mxu0
    %848 = vdwg.mxu0
    %849 = vmatpush.bf16.msra.mxu0 %v583
    %850 = vmatpush.bf16.msra.mxu0 %v581
    %851 = vmatpush.bf16.msra.mxu0 %v579
    %852 = vmatpush.bf16.msra.mxu0 %v577
    %853 = vmatpush.bf16.msra.mxu0 %v575
    %854 = vmatpush.bf16.msra.mxu0 %v573
    %855 = vmatpush.bf16.msra.mxu0 %v571
    %856 = vmatpush.bf16.msra.mxu0 %v569
    %857 = vmatmul.bf16.gmra.mxu0 %v216
    %v858 = vpop.f32.mrf.mxu0
    %v859 = vadd.f32 %v846, %v858
    %v860 = vpop.f32.mrf.mxu0
    %861 = vdwg.mxu0
    %862 = vmatpush.bf16.msra.mxu0 %v599
    %863 = vmatpush.bf16.msra.mxu0 %v597
    %864 = vmatpush.bf16.msra.mxu0 %v595
    %865 = vmatpush.bf16.msra.mxu0 %v593
    %866 = vmatpush.bf16.msra.mxu0 %v591
    %867 = vmatpush.bf16.msra.mxu0 %v589
    %868 = vmatpush.bf16.msra.mxu0 %v587
    %869 = vmatpush.bf16.msra.mxu0 %v585
    %870 = vmatmul.bf16.gmra.mxu0 %v217
    %v871 = vpop.f32.mrf.mxu0
    %v872 = vadd.f32 %v859, %v871
    %v873 = vpop.f32.mrf.mxu0
    %874 = vdwg.mxu0
    %875 = vmatpush.bf16.msra.mxu0 %v615
    %876 = vmatpush.bf16.msra.mxu0 %v613
    %877 = vmatpush.bf16.msra.mxu0 %v611
    %878 = vmatpush.bf16.msra.mxu0 %v609
    %879 = vmatpush.bf16.msra.mxu0 %v607
    %880 = vmatpush.bf16.msra.mxu0 %v605
    %881 = vmatpush.bf16.msra.mxu0 %v603
    %882 = vmatpush.bf16.msra.mxu0 %v601
    %883 = vmatmul.bf16.gmra.mxu0 %v218
    %v884 = vpop.f32.mrf.mxu0
    %v885 = vadd.f32 %v872, %v884
    %v886 = vpop.f32.mrf.mxu0
    %887 = vdwg.mxu0
    %888 = vmatpush.bf16.msra.mxu0 0
    %889 = vmatpush.bf16.msra.mxu0 0
    %890 = vmatpush.bf16.msra.mxu0 0
    %891 = vmatpush.bf16.msra.mxu0 0
    %892 = vmatpush.bf16.msra.mxu0 0
    %893 = vmatpush.bf16.msra.mxu0 0
    %894 = vmatpush.bf16.msra.mxu0 0
    %895 = vmatpush.bf16.msra.mxu0 %v617
    %896 = vmatmul.bf16.gmra.mxu0 %v717
    %v897 = vpop.f32.mrf.mxu0
    %v898 = vadd.f32 %v885, %v897
    %v899 = vpop.f32.mrf.mxu0
    %900 = vdwg.mxu0
    %v901 = vmax.f32 %v807, 0.0
    %v902 = vmax.f32 %v898, 0.0
    %v903 = vpack.c.bf16 %v901, %v901
    %v904 = vpack.c.bf16 %v902, %v902
    %v905 = vld [vmem:[#allocation8] sm:$0xf]
    %v906 = vld [vmem:[#allocation8 + $0x4] sm:$0xf]
    %v907 = vld [vmem:[#allocation8 + $0x8] sm:$0xf]
    %v908 = vld [vmem:[#allocation8 + $0xc] sm:$0xf]
    %v909 = vld [vmem:[#allocation8 + $0x10] sm:$0xf]
    %v910 = vld [vmem:[#allocation8 + $0x14] sm:$0xf]
    %v911 = vld [vmem:[#allocation8 + $0x18] sm:$0xf]
    %v912 = vld [vmem:[#allocation8 + $0x1c] sm:$0xf]
    %v913 = vld [vmem:[#allocation8 + $0x20] sm:$0xf]
    %v914 = vld [vmem:[#allocation8 + $0x24] sm:$0xf]
    %v915 = vld [vmem:[#allocation8 + $0x28] sm:$0xf]
    %v916 = vld [vmem:[#allocation8 + $0x2c] sm:$0xf]
    %v917 = vld [vmem:[#allocation8 + $0x30] sm:$0xf]
    %v918 = vld [vmem:[#allocation8 + $0x34] sm:$0xf]
    %v919 = vld [vmem:[#allocation8 + $0x38] sm:$0xf]
    %v920 = vld [vmem:[#allocation8 + $0x3c] sm:$0xf]
    %v921 = vld [vmem:[#allocation8 + $0x40] sm:$0xf]
    %v922 = vld [vmem:[#allocation8 + $0x44] sm:$0xf]
    %v923 = vld [vmem:[#allocation8 + $0x48] sm:$0xf]
    %v924 = vld [vmem:[#allocation8 + $0x4c] sm:$0xf]
    %v925 = vld [vmem:[#allocation8 + $0x50] sm:$0xf]
    %v926 = vld [vmem:[#allocation8 + $0x54] sm:$0xf]
    %v927 = vld [vmem:[#allocation8 + $0x58] sm:$0xf]
    %v928 = vld [vmem:[#allocation8 + $0x5c] sm:$0xf]
    %v929 = vld [vmem:[#allocation8 + $0x60] sm:$0xf]
    %v930 = vld [vmem:[#allocation8 + $0x64] sm:$0xf]
    %v931 = vld [vmem:[#allocation8 + $0x68] sm:$0xf]
    %v932 = vld [vmem:[#allocation8 + $0x6c] sm:$0xf]
    %v933 = vld [vmem:[#allocation8 + $0x70] sm:$0xf]
    %v934 = vld [vmem:[#allocation8 + $0x74] sm:$0xf]
    %v935 = vld [vmem:[#allocation8 + $0x78] sm:$0xf]
    %v936 = vld [vmem:[#allocation8 + $0x7c] sm:$0xf]
    %v937 = vld [vmem:[%s4] sm:$0x1]
    %v939 = vperm.slane %v937, 0
    %v973 = vunpack.c.l.b16 %v905
    %v974 = vunpack.c.l.b16 %v906
    %v975 = vunpack.c.l.b16 %v907
    %v976 = vunpack.c.l.b16 %v908
    %v977 = vunpack.c.l.b16 %v909
    %v978 = vunpack.c.l.b16 %v910
    %v979 = vunpack.c.l.b16 %v911
    %v980 = vunpack.c.l.b16 %v912
    %v981 = vunpack.c.l.b16 %v913
    %v982 = vunpack.c.l.b16 %v914
    %v983 = vunpack.c.l.b16 %v915
    %v984 = vunpack.c.l.b16 %v916
    %v985 = vunpack.c.l.b16 %v917
    %v986 = vunpack.c.l.b16 %v918
    %v987 = vunpack.c.l.b16 %v919
    %v988 = vunpack.c.l.b16 %v920
    %v989 = vunpack.c.l.b16 %v921
    %v990 = vunpack.c.l.b16 %v922
    %v991 = vunpack.c.l.b16 %v923
    %v992 = vunpack.c.l.b16 %v924
    %v993 = vunpack.c.l.b16 %v925
    %v994 = vunpack.c.l.b16 %v926
    %v995 = vunpack.c.l.b16 %v927
    %v996 = vunpack.c.l.b16 %v928
    %v997 = vunpack.c.l.b16 %v929
    %v998 = vunpack.c.l.b16 %v930
    %v999 = vunpack.c.l.b16 %v931
    %v1000 = vunpack.c.l.b16 %v932
    %v1001 = vunpack.c.l.b16 %v933
    %v1002 = vunpack.c.l.b16 %v934
    %v1003 = vunpack.c.l.b16 %v935
    %v1004 = vunpack.c.l.b16 %v936
    %v1005 = vpack.c.b16 %v974, %v973
    %v1006 = vpack.c.b16 %v976, %v975
    %v1007 = vpack.c.b16 %v978, %v977
    %v1008 = vpack.c.b16 %v980, %v979
    %v1009 = vpack.c.b16 %v982, %v981
    %v1010 = vpack.c.b16 %v984, %v983
    %v1011 = vpack.c.b16 %v986, %v985
    %v1012 = vpack.c.b16 %v988, %v987
    %v1013 = vpack.c.b16 %v990, %v989
    %v1014 = vpack.c.b16 %v992, %v991
    %v1015 = vpack.c.b16 %v994, %v993
    %v1016 = vpack.c.b16 %v996, %v995
    %v1017 = vpack.c.b16 %v998, %v997
    %v1018 = vpack.c.b16 %v1000, %v999
    %v1019 = vpack.c.b16 %v1002, %v1001
    %v1020 = vpack.c.b16 %v1004, %v1003
    %1037 = vmatpush.bf16.msra.mxu0 %v1012
    %1038 = vmatpush.bf16.msra.mxu0 %v1011
    %1039 = vmatpush.bf16.msra.mxu0 %v1010
    %1040 = vmatpush.bf16.msra.mxu0 %v1009
    %1041 = vmatpush.bf16.msra.mxu0 %v1008
    %1042 = vmatpush.bf16.msra.mxu0 %v1007
    %1043 = vmatpush.bf16.msra.mxu0 %v1006
    %1044 = vmatpush.bf16.msra.mxu0 %v1005
    %1045 = vmatmul.bf16.gmra.mxu0 %v903
    %v1046 = vpop.f32.mrf.mxu0
    %v1047 = vadd.f32 %v939, %v1046
    %v1048 = vpop.f32.mrf.mxu0
    %1049 = vdwg.mxu0
    %1050 = vmatpush.bf16.msra.mxu0 %v1020
    %1051 = vmatpush.bf16.msra.mxu0 %v1019
    %1052 = vmatpush.bf16.msra.mxu0 %v1018
    %1053 = vmatpush.bf16.msra.mxu0 %v1017
    %1054 = vmatpush.bf16.msra.mxu0 %v1016
    %1055 = vmatpush.bf16.msra.mxu0 %v1015
    %1056 = vmatpush.bf16.msra.mxu0 %v1014
    %1057 = vmatpush.bf16.msra.mxu0 %v1013
    %1058 = vmatmul.bf16.gmra.mxu0 %v904
    %v1059 = vpop.f32.mrf.mxu0
    %v1060 = vadd.f32 %v1047, %v1059
    %v1061 = vpop.f32.mrf.mxu0
    %1062 = vdwg.mxu0
    %v1063 = vmax.f32 %v1060, 0.0
    %v1064 = vpack.c.bf16 %v1063, %v1063
    %v1065 = vld [vmem:[#allocation10] sm:$0xf]
    %v1066 = vld [vmem:[#allocation10 + $0x4] sm:$0xf]
    %v1067 = vld [vmem:[#allocation10 + $0x8] sm:$0xf]
    %v1068 = vld [vmem:[#allocation10 + $0xc] sm:$0xf]
    %v1069 = vld [vmem:[#allocation10 + $0x10] sm:$0xf]
    %v1070 = vld [vmem:[#allocation10 + $0x14] sm:$0xf]
    %v1071 = vld [vmem:[#allocation10 + $0x18] sm:$0xf]
    %v1072 = vld [vmem:[#allocation10 + $0x1c] sm:$0xf]
    %v1073 = vld [vmem:[#allocation10 + $0x20] sm:$0xf]
    %v1074 = vld [vmem:[#allocation10 + $0x24] sm:$0xf]
    %v1075 = vld [vmem:[#allocation10 + $0x28] sm:$0xf]
    %v1076 = vld [vmem:[#allocation10 + $0x2c] sm:$0xf]
    %v1077 = vld [vmem:[#allocation10 + $0x30] sm:$0xf]
    %v1078 = vld [vmem:[#allocation10 + $0x34] sm:$0xf]
    %v1079 = vld [vmem:[#allocation10 + $0x38] sm:$0xf]
    %v1080 = vld [vmem:[#allocation10 + $0x3c] sm:$0xf]
    %v1081 = vld [vmem:[%s6] sm:$0x1]
    %v1083 = vperm.slane %v1081, 0
    %v1101 = vunpack.c.l.b16 %v1065
    %v1102 = vunpack.c.l.b16 %v1066
    %v1103 = vunpack.c.l.b16 %v1067
    %v1104 = vunpack.c.l.b16 %v1068
    %v1105 = vunpack.c.l.b16 %v1069
    %v1106 = vunpack.c.l.b16 %v1070
    %v1107 = vunpack.c.l.b16 %v1071
    %v1108 = vunpack.c.l.b16 %v1072
    %v1109 = vunpack.c.l.b16 %v1073
    %v1110 = vunpack.c.l.b16 %v1074
    %v1111 = vunpack.c.l.b16 %v1075
    %v1112 = vunpack.c.l.b16 %v1076
    %v1113 = vunpack.c.l.b16 %v1077
    %v1114 = vunpack.c.l.b16 %v1078
    %v1115 = vunpack.c.l.b16 %v1079
    %v1116 = vunpack.c.l.b16 %v1080
    %v1117 = vpack.c.b16 %v1102, %v1101
    %v1118 = vpack.c.b16 %v1104, %v1103
    %v1119 = vpack.c.b16 %v1106, %v1105
    %v1120 = vpack.c.b16 %v1108, %v1107
    %v1121 = vpack.c.b16 %v1110, %v1109
    %v1122 = vpack.c.b16 %v1112, %v1111
    %v1123 = vpack.c.b16 %v1114, %v1113
    %v1124 = vpack.c.b16 %v1116, %v1115
    %1133 = vmatpush.bf16.msra.mxu0 %v1124
    %1134 = vmatpush.bf16.msra.mxu0 %v1123
    %1135 = vmatpush.bf16.msra.mxu0 %v1122
    %1136 = vmatpush.bf16.msra.mxu0 %v1121
    %1137 = vmatpush.bf16.msra.mxu0 %v1120
    %1138 = vmatpush.bf16.msra.mxu0 %v1119
    %1139 = vmatpush.bf16.msra.mxu0 %v1118
    %1140 = vmatpush.bf16.msra.mxu0 %v1117
    %1141 = vmatmul.bf16.gmra.mxu0 %v1064
    %v1142 = vpop.f32.mrf.mxu0
    %v1143 = vadd.f32 %v1083, %v1142
    %v1144 = vpop.f32.mrf.mxu0
    %1145 = vdwg.mxu0
    %v1146 = vpack.c.bf16 %v1143, %v1143
    %1147 = vst [vmem:[#allocation11] sm:$0x3] %v1146
    // Predicated region
    $region50: #{fused_mlp.1} parent=1 // pred_check
      _
    $region51: #{fused_mlp.1} parent=1 // pred_check_branch
      %1149 = sbr.rel (0) target = $region53
    $region52: #{fused_mlp.1} parent=1 // pred_region
      %1151 = vsyncadd [#allocation4], 0
      %s1153 = sshll.u32 [#allocation11], 4
      %s1154 = int_to_ptr.vmem [resolvable:$true] %s1153
      %s1155 = sshll.u32 %s7, 4
      %s1156 = int_to_ptr.hbm [resolvable:$true] %s1155
      %1158 = dma.vmem_to_hbm [thread:$0]  %s1154, 32, %s1156, [#allocation4]
    $region53: #{fused_mlp.1} parent=1 // pred_fallthru
      _
    // Predicated region
    $region54: #{fused_mlp.1} parent=1 // pred_check
      _
    $region55: #{fused_mlp.1} parent=1 // pred_check_branch
      %1160 = sbr.rel (0) target = $region57
    $region56: #{fused_mlp.1} parent=1 // pred_region
      %1162 = dma.done [#allocation4], 32
    $region57: #{fused_mlp.1} parent=1 // pred_fallthru
      _
    %1163 = vsyncpa [#allocation3], 1
    %1164 = vsyncpa [#allocation6], 1
    %1165 = vsyncpa [#allocation9], 1
    %1166 = vsyncpa [#allocation4], 1

</llo_original>
